<compile_context>
chip_gen: v7x
topology: tpu7x:2x2x1
jax: 0.10.0
libtpu: 0.0.40
codegen_flags: <defaults>
</compile_context>

<pallas_src>
import math
from functools import partial

import jax
import jax.numpy as jnp
from jax.experimental import pallas as pl
from jax.experimental.pallas import tpu as pltpu


# ---------------------------------------------------------------------------
# Small helpers
# ---------------------------------------------------------------------------
def _round_up(n, m):
    return ((n + m - 1) // m) * m


def _pad_axis(a, axis, target):
    pad = target - a.shape[axis]
    if pad == 0:
        return a
    widths = [(0, 0)] * a.ndim
    widths[axis] = (0, pad)
    return jnp.pad(a, widths)


def _vmem_budget_bytes():
    """Usable VMEM budget in bytes (~87.5% of physical, headroom for scratch)."""
    cap = 64 * 1024 * 1024                      # conservative fallback (v7x per-TC)
    try:
        info = pltpu.get_tpu_info()
        cap = int(getattr(info, "vmem_capacity_bytes", cap))
    except Exception:
        pass
    return (cap // 8) * 7


def _pick_tm(M, tm_max, cap):
    """Token-tile size: bf16-sublane aligned, padding-aware, >=2 tiles if M big."""
    m_pad = _round_up(max(M, 1), 16)
    limit = max(16, min(tm_max, cap))
    if m_pad <= limit:
        # Whole token range fits one tile.
        if M >= 256:
            # Split into (at least) two tiles so both v7x TensorCores get work.
            return _round_up(-(-M // 2), 16)
        return m_pad
    t = limit
    if t >= 256:
        t = (t // 256) * 256
    elif t >= 128:
        t = 128
    else:
        t = max(16, (t // 16) * 16)
    return t


def _pick_th(Hp, Dp, budget, out_itemsize, wsize):
    """Hidden-chunk size for the reduction path (must divide Hp)."""
    for th in (512, 256, 128):
        if Hp % th:
            continue
        weight_bytes = 2 * 3 * Dp * th * wsize               # double-buffered
        per_row = Dp * (2 * wsize + 4 + 2 * out_itemsize) + 12 * th
        if weight_bytes + 16 * per_row <= budget:
            return th
    return 128


# ---------------------------------------------------------------------------
# Parameter preparation: pad + cast ONCE (not per forward call).
# Expects weights already stored in "x @ W" layout: w1 (D,H), w3 (D,H), w2 (H,D)
# (the transpose of nn.Linear.weight), biases (H,)/(1,H) and (D,)/(1,D).
# ---------------------------------------------------------------------------
def prepare_expert_params(params, *, compute_dtype=jnp.bfloat16):
    w1, w3, w2 = params["w1"], params["w3"], params["w2"]
    D, H = w1.shape
    Dp = _round_up(D, 128)
    Hp = _round_up(H, 128)

    def bias2d(b, n):
        b = jnp.asarray(b, jnp.float32).reshape(1, -1)
        return _pad_axis(b, 1, n)

    # Zero padding is exact: padded hidden columns give silu(0)*0 = 0 and the
    # corresponding (zero) w2 rows contribute nothing; padded D columns are
    # stripped in the wrapper.
    return {
        "w1": _pad_axis(_pad_axis(w1, 0, Dp), 1, Hp).astype(compute_dtype),
        "w3": _pad_axis(_pad_axis(w3, 0, Dp), 1, Hp).astype(compute_dtype),
        "w2": _pad_axis(_pad_axis(w2, 0, Hp), 1, Dp).astype(compute_dtype),
        "b1": bias2d(params["b1"], Hp),
        "b3": bias2d(params["b3"], Hp),
        "b2": bias2d(params["b2"], Dp),
    }


# ---------------------------------------------------------------------------
# Kernels
# ---------------------------------------------------------------------------
def _expert_kernel_resident(x_ref, w1_ref, b1_ref, w3_ref, b3_ref, w2_ref,
                            b2_ref, o_ref):
    # Weights stay resident in VMEM across all token tiles (constant index_map).
    x = x_ref[...]                                               # (tm, Dp) bf16
    h1 = jnp.dot(x, w1_ref[...], preferred_element_type=jnp.float32) + b1_ref[...]
    h3 = jnp.dot(x, w3_ref[...], preferred_element_type=jnp.float32) + b3_ref[...]
    g = (h1 * jax.nn.sigmoid(h1)) * h3                           # SiLU gate (f32)
    o_ref[...] = (jnp.dot(g.astype(w2_ref.dtype), w2_ref[...],
                          preferred_element_type=jnp.float32)
                  + b2_ref[...]).astype(o_ref.dtype)


def _expert_kernel_reduce(x_ref, w1_ref, b1_ref, w3_ref, b3_ref, w2_ref,
                          b2_ref, o_ref, acc_ref):
    k = pl.program_id(1)                          # hidden (reduction) tile index

    @pl.when(k == 0)
    def _init():
        acc_ref[...] = jnp.zeros_like(acc_ref)

    x = x_ref[...]                                               # (tm, Dp) bf16
    h1 = jnp.dot(x, w1_ref[...], preferred_element_type=jnp.float32) + b1_ref[...]
    h3 = jnp.dot(x, w3_ref[...], preferred_element_type=jnp.float32) + b3_ref[...]
    g = (h1 * jax.nn.sigmoid(h1)) * h3                           # SiLU gate (f32)
    acc_ref[...] += jnp.dot(g.astype(w2_ref.dtype), w2_ref[...],
                            preferred_element_type=jnp.float32)

    @pl.when(k == pl.num_programs(1) - 1)
    def _finalize():
        o_ref[...] = (acc_ref[...] + b2_ref[...]).astype(o_ref.dtype)


# ---------------------------------------------------------------------------
# Wrapper
# ---------------------------------------------------------------------------
def expert_forward(x, prepared, *, tm=None, th=None):
    orig_shape = x.shape
    D = orig_shape[-1]
    M = math.prod(orig_shape[:-1]) if len(orig_shape) > 1 else 1
    out_dtype = x.dtype
    out_isz = jnp.dtype(out_dtype).itemsize

    w1, w3, w2 = prepared["w1"], prepared["w3"], prepared["w2"]
    b1, b3, b2 = prepared["b1"], prepared["b3"], prepared["b2"]
    Dp, Hp = w1.shape
    wsz = w1.dtype.itemsize
    assert D <= Dp, "input feature dim larger than prepared weights"

    budget = _vmem_budget_bytes()
    bias_bytes = 2 * (2 * Hp + Dp) * 4 * 2

    # ---- choose weight-resident vs hidden-reduction path --------------------
    weight_res_bytes = 2 * 3 * Dp * Hp * wsz                    # double-buffered
    per_row_res = Dp * (2 * wsz + 2 * out_isz) + 12 * Hp        # x, out, interm.
    resident = (weight_res_bytes + bias_bytes + 16 * per_row_res) <= budget
    if th is not None and th != Hp:
        resident = False

    if resident:
        th = Hp
        if tm is None:
            tm_max = (budget - weight_res_bytes - bias_bytes) // per_row_res
            tm = _pick_tm(M, tm_max, 512)
    else:
        if th is None:
            th = _pick_th(Hp, Dp, budget - bias_bytes, out_isz, wsz)
        if Hp % th:
            raise ValueError(f"hidden tile {th} must divide padded hidden {Hp}")
        if tm is None:
            per_row_red = Dp * (2 * wsz + 4 + 2 * out_isz) + 12 * th
            w_bytes = 2 * 3 * Dp * th * wsz
            tm_max = (budget - w_bytes - bias_bytes) // per_row_red
            tm = _pick_tm(M, tm_max, 1024)

    Mp = _round_up(M, tm)
    x2 = _pad_axis(_pad_axis(x.reshape(M, D), 0, Mp), 1, Dp).astype(w1.dtype)

    if resident:
        out = pl.pallas_call(
            _expert_kernel_resident,
            out_shape=jax.ShapeDtypeStruct((Mp, Dp), out_dtype),
            grid=(Mp // tm,),
            in_specs=[
                pl.BlockSpec((tm, Dp), lambda i: (i, 0)),   # x tile
                pl.BlockSpec((Dp, Hp), lambda i: (0, 0)),   # w1 (resident)
                pl.BlockSpec((1, Hp), lambda i: (0, 0)),    # b1
                pl.BlockSpec((Dp, Hp), lambda i: (0, 0)),   # w3 (resident)
                pl.BlockSpec((1, Hp), lambda i: (0, 0)),    # b3
                pl.BlockSpec((Hp, Dp), lambda i: (0, 0)),   # w2 (resident)
                pl.BlockSpec((1, Dp), lambda i: (0, 0)),    # b2
            ],
            out_specs=pl.BlockSpec((tm, Dp), lambda i: (i, 0)),
            compiler_params=pltpu.CompilerParams(
                dimension_semantics=("parallel",),
                vmem_limit_bytes=budget),
        )(x2, w1, b1, w3, b3, w2, b2)
    else:
        out = pl.pallas_call(
            _expert_kernel_reduce,
            out_shape=jax.ShapeDtypeStruct((Mp, Dp), out_dtype),
            grid=(Mp // tm, Hp // th),
            in_specs=[
                pl.BlockSpec((tm, Dp), lambda i, k: (i, 0)),    # x tile
                pl.BlockSpec((Dp, th), lambda i, k: (0, k)),    # w1 hidden chunk
                pl.BlockSpec((1, th), lambda i, k: (0, k)),     # b1 hidden chunk
                pl.BlockSpec((Dp, th), lambda i, k: (0, k)),    # w3 hidden chunk
                pl.BlockSpec((1, th), lambda i, k: (0, k)),     # b3 hidden chunk
                pl.BlockSpec((th, Dp), lambda i, k: (k, 0)),    # w2 hidden chunk
                pl.BlockSpec((1, Dp), lambda i, k: (0, 0)),     # b2
            ],
            out_specs=pl.BlockSpec((tm, Dp), lambda i, k: (i, 0)),
            scratch_shapes=[pltpu.VMEM((tm, Dp), jnp.float32)],
            compiler_params=pltpu.CompilerParams(
                dimension_semantics=("parallel", "arbitrary"),
                vmem_limit_bytes=budget),
        )(x2, w1, b1, w3, b3, w2, b2)

    return out[:M, :D].reshape(orig_shape)


# ---------------------------------------------------------------------------
# References
# ---------------------------------------------------------------------------
def expert_reference_f32(x, p):
    h1 = x @ p["w1"] + p["b1"]
    h3 = x @ p["w3"] + p["b3"]
    g = jax.nn.silu(h1) * h3
    return g @ p["w2"] + p["b2"]


def expert_reference_bf16(x, p):
    # Mirrors the kernel's precision choices (bf16 matmul operands, f32 accum).
    xb = x.astype(jnp.bfloat16)
    h1 = jnp.dot(xb, p["w1"].astype(jnp.bfloat16),
                 preferred_element_type=jnp.float32) + p["b1"]
    h3 = jnp.dot(xb, p["w3"].astype(jnp.bfloat16),
                 preferred_element_type=jnp.float32) + p["b3"]
    g = (h1 * jax.nn.sigmoid(h1)) * h3
    return jnp.dot(g.astype(jnp.bfloat16), p["w2"].astype(jnp.bfloat16),
                   preferred_element_type=jnp.float32) + p["b2"]


# ---------------------------------------------------------------------------
if __name__ == "__main__":
    N, S, D = 2, 8, 128                 # batch, seq, dim
    mlp_ratio = 4.0
    H = int(mlp_ratio * D)              # 512

    key = jax.random.PRNGKey(0)
    kx, k1, k2, k3, k4, k5, k6 = jax.random.split(key, 7)
    params = {
        "w1": jax.random.normal(k1, (D, H), jnp.float32) * (1.0 / math.sqrt(D)),
        "b1": jax.random.normal(k2, (1, H), jnp.float32) * 0.05,
        "w3": jax.random.normal(k3, (D, H), jnp.float32) * (1.0 / math.sqrt(D)),
        "b3": jax.random.normal(k4, (1, H), jnp.float32) * 0.05,
        "w2": jax.random.normal(k5, (H, D), jnp.float32) * (1.0 / math.sqrt(H)),
        "b2": jax.random.normal(k6, (1, D), jnp.float32) * 0.05,
    }
    x = jax.random.normal(kx, (N, S, D), jnp.float32)

    # Pad & cast weights once (outside the per-call path).
    prepared = jax.tree_util.tree_map(jax.block_until_ready,
                                      prepare_expert_params(params))

    ref_bf16 = expert_reference_bf16(x, params)
    ref_f32 = expert_reference_f32(x, params)

    def check(name, out):
        assert out.shape == (N, S, D), (name, out.shape)
        if not jnp.allclose(out, ref_bf16, atol=2e-3, rtol=2e-3):
            raise AssertionError(
                f"{name}: mismatch vs bf16 reference, max abs err = "
                f"{jnp.max(jnp.abs(out - ref_bf16))}")
        if not jnp.allclose(out, ref_f32, atol=3e-2, rtol=3e-2):
            raise AssertionError(
                f"{name}: mismatch vs f32 reference, max abs err = "
                f"{jnp.max(jnp.abs(out - ref_f32))}")

    # Default path (weight-resident here: padded weights are tiny).
    fwd = jax.jit(expert_forward)
    out = jax.block_until_ready(fwd(x, prepared))
    check("resident", out)

    # Also exercise the hidden-reduction path (forced small tiles).
    fwd_red = jax.jit(partial(expert_forward, tm=16, th=128))
    out_red = jax.block_until_ready(fwd_red(x, prepared))
    check("reduction", out_red)

    print("KERNEL_OK")
</pallas_src>

<mosaic_0001>
module attributes {stable_mosaic.version = 11 : i64} {
  func.func @_expert_kernel_resident(%arg0: i32, %arg1: memref<16x128xbf16, #tpu.memory_space<vmem>>, %arg2: memref<128x512xbf16, #tpu.memory_space<vmem>>, %arg3: memref<1x512xf32, #tpu.memory_space<vmem>>, %arg4: memref<128x512xbf16, #tpu.memory_space<vmem>>, %arg5: memref<1x512xf32, #tpu.memory_space<vmem>>, %arg6: memref<512x128xbf16, #tpu.memory_space<vmem>>, %arg7: memref<1x128xf32, #tpu.memory_space<vmem>>, %arg8: memref<16x128xf32, #tpu.memory_space<vmem>>) attributes {dimension_semantics = [#tpu.dimension_semantics<parallel>], iteration_bounds = array<i64: 1>, scalar_prefetch = 0 : i64, scratch_operands = 0 : i64, tpu.core_type = #tpu.core_type<tc>, window_params = [{transform_indices = @transform_0, window_bounds = array<i64: 16, 128>}, {pipeline_mode = #tpu.pipeline_mode<synchronous>, transform_indices = @transform_1, window_bounds = array<i64: 128, 512>}, {pipeline_mode = #tpu.pipeline_mode<synchronous>, transform_indices = @transform_2, window_bounds = array<i64: 1, 512>}, {pipeline_mode = #tpu.pipeline_mode<synchronous>, transform_indices = @transform_3, window_bounds = array<i64: 128, 512>}, {pipeline_mode = #tpu.pipeline_mode<synchronous>, transform_indices = @transform_4, window_bounds = array<i64: 1, 512>}, {pipeline_mode = #tpu.pipeline_mode<synchronous>, transform_indices = @transform_5, window_bounds = array<i64: 512, 128>}, {pipeline_mode = #tpu.pipeline_mode<synchronous>, transform_indices = @transform_6, window_bounds = array<i64: 1, 128>}, {transform_indices = @transform_7, window_bounds = array<i64: 16, 128>}]} {
    %c0 = arith.constant 0 : index
    %c0_0 = arith.constant 0 : index
    %0 = vector.load %arg1[%c0, %c0_0] : memref<16x128xbf16, #tpu.memory_space<vmem>>, vector<16x128xbf16>
    %c0_1 = arith.constant 0 : index
    %c0_2 = arith.constant 0 : index
    %1 = vector.load %arg2[%c0_1, %c0_2] : memref<128x512xbf16, #tpu.memory_space<vmem>>, vector<128x512xbf16>
    %cst = arith.constant dense<0.000000e+00> : vector<16x512xf32>
    %2 = tpu.matmul %0, %1, %cst {dimension_numbers = #tpu.dot_dimension_numbers<[1], [0], [0], [1], [0, 0, 1, 1], [], []>} : vector<16x128xbf16>, vector<128x512xbf16>, vector<16x512xf32> -> vector<16x512xf32>
    %c0_3 = arith.constant 0 : index
    %c0_4 = arith.constant 0 : index
    %3 = vector.load %arg3[%c0_3, %c0_4] : memref<1x512xf32, #tpu.memory_space<vmem>>, vector<1x512xf32>
    %4 = vector.broadcast %3 : vector<1x512xf32> to vector<16x512xf32>
    %5 = arith.addf %2, %4 : vector<16x512xf32>
    %c0_5 = arith.constant 0 : index
    %c0_6 = arith.constant 0 : index
    %6 = vector.load %arg4[%c0_5, %c0_6] : memref<128x512xbf16, #tpu.memory_space<vmem>>, vector<128x512xbf16>
    %cst_7 = arith.constant dense<0.000000e+00> : vector<16x512xf32>
    %7 = tpu.matmul %0, %6, %cst_7 {dimension_numbers = #tpu.dot_dimension_numbers<[1], [0], [0], [1], [0, 0, 1, 1], [], []>} : vector<16x128xbf16>, vector<128x512xbf16>, vector<16x512xf32> -> vector<16x512xf32>
    %c0_8 = arith.constant 0 : index
    %c0_9 = arith.constant 0 : index
    %8 = vector.load %arg5[%c0_8, %c0_9] : memref<1x512xf32, #tpu.memory_space<vmem>>, vector<1x512xf32>
    %9 = vector.broadcast %8 : vector<1x512xf32> to vector<16x512xf32>
    %10 = arith.addf %7, %9 : vector<16x512xf32>
    %11 = arith.negf %5 : vector<16x512xf32>
    %12 = math.exp %11 : vector<16x512xf32>
    %cst_10 = arith.constant 1.000000e+00 : f32
    %13 = vector.broadcast %cst_10 : f32 to vector<16x512xf32>
    %14 = arith.addf %13, %12 : vector<16x512xf32>
    %15 = arith.divf %13, %14 : vector<16x512xf32>
    %16 = arith.mulf %5, %15 : vector<16x512xf32>
    %17 = arith.mulf %16, %10 : vector<16x512xf32>
    %18 = arith.truncf %17 : vector<16x512xf32> to vector<16x512xbf16>
    %c0_11 = arith.constant 0 : index
    %c0_12 = arith.constant 0 : index
    %19 = vector.load %arg6[%c0_11, %c0_12] : memref<512x128xbf16, #tpu.memory_space<vmem>>, vector<512x128xbf16>
    %cst_13 = arith.constant dense<0.000000e+00> : vector<16x128xf32>
    %20 = tpu.matmul %18, %19, %cst_13 {dimension_numbers = #tpu.dot_dimension_numbers<[1], [0], [0], [1], [0, 0, 1, 1], [], []>} : vector<16x512xbf16>, vector<512x128xbf16>, vector<16x128xf32> -> vector<16x128xf32>
    %c0_14 = arith.constant 0 : index
    %c0_15 = arith.constant 0 : index
    %21 = vector.load %arg7[%c0_14, %c0_15] : memref<1x128xf32, #tpu.memory_space<vmem>>, vector<1x128xf32>
    %22 = vector.broadcast %21 : vector<1x128xf32> to vector<16x128xf32>
    %23 = arith.addf %20, %22 : vector<16x128xf32>
    %c0_16 = arith.constant 0 : index
    %c0_17 = arith.constant 0 : index
    %24 = vector.load %arg8[%c0_16, %c0_17] : memref<16x128xf32, #tpu.memory_space<vmem>>, vector<16x128xf32>
    tpu.vector_store %arg8[%c0_16, %c0_17], %23 {strides = array<i32>} : memref<16x128xf32, #tpu.memory_space<vmem>>, vector<16x128xf32>,
    return
  }
  func.func @transform_0(%arg0: i32) -> (i32, i32) {
    %c0_i32 = arith.constant 0 : i32
    %c0_i32_0 = arith.constant 0 : i32
    return %arg0, %c0_i32 : i32, i32
  }
  func.func @transform_1(%arg0: i32) -> (i32, i32) {
    %c0_i32 = arith.constant 0 : i32
    %c0_i32_0 = arith.constant 0 : i32
    %c0_i32_1 = arith.constant 0 : i32
    return %c0_i32, %c0_i32_0 : i32, i32
  }
  func.func @transform_2(%arg0: i32) -> (i32, i32) {
    %c0_i32 = arith.constant 0 : i32
    %c0_i32_0 = arith.constant 0 : i32
    %c0_i32_1 = arith.constant 0 : i32
    return %c0_i32, %c0_i32_0 : i32, i32
  }
  func.func @transform_3(%arg0: i32) -> (i32, i32) {
    %c0_i32 = arith.constant 0 : i32
    %c0_i32_0 = arith.constant 0 : i32
    %c0_i32_1 = arith.constant 0 : i32
    return %c0_i32, %c0_i32_0 : i32, i32
  }
  func.func @transform_4(%arg0: i32) -> (i32, i32) {
    %c0_i32 = arith.constant 0 : i32
    %c0_i32_0 = arith.constant 0 : i32
    %c0_i32_1 = arith.constant 0 : i32
    return %c0_i32, %c0_i32_0 : i32, i32
  }
  func.func @transform_5(%arg0: i32) -> (i32, i32) {
    %c0_i32 = arith.constant 0 : i32
    %c0_i32_0 = arith.constant 0 : i32
    %c0_i32_1 = arith.constant 0 : i32
    return %c0_i32, %c0_i32_0 : i32, i32
  }
  func.func @transform_6(%arg0: i32) -> (i32, i32) {
    %c0_i32 = arith.constant 0 : i32
    %c0_i32_0 = arith.constant 0 : i32
    %c0_i32_1 = arith.constant 0 : i32
    return %c0_i32, %c0_i32_0 : i32, i32
  }
  func.func @transform_7(%arg0: i32) -> (i32, i32) {
    %c0_i32 = arith.constant 0 : i32
    %c0_i32_0 = arith.constant 0 : i32
    return %arg0, %c0_i32 : i32, i32
  }
}

</mosaic_0001>

<llo_original>
// kernel: expert_forward.1
$region0: #{expert_forward.1}
  #allocation0 [shape = 'u32[]', space=smem, size = 0x4, offset = 0x4, fixed_abs, tag = 'smem constant byte address 0x4 - core index']
  #allocation1 [shape = 'u32[144,128]{1,0:T(1,128)}', space=vmem, size = 0x12000, scoped, tag = 'internal scratch']
  %s0 = inlined_call_operand.vmem [shape: bf16[16,128], index: 0, kind: input, shape index: {}]
  %s1 = inlined_call_operand.hbm [shape: bf16[128,512], index: 1, kind: input, shape index: {}]
  %s2 = inlined_call_operand.vmem [shape: f32[1,512], index: 2, kind: input, shape index: {}]
  %s3 = inlined_call_operand.hbm [shape: bf16[128,512], index: 3, kind: input, shape index: {}]
  %s4 = inlined_call_operand.vmem [shape: f32[1,512], index: 4, kind: input, shape index: {}]
  %s5 = inlined_call_operand.hbm [shape: bf16[512,128], index: 5, kind: input, shape index: {}]
  %s6 = inlined_call_operand.vmem [shape: f32[1,128], index: 6, kind: input, shape index: {}]
  %s7 = inlined_call_operand.hbm [shape: f32[16,128], index: 7, kind: output, shape index: {}]
  %s8 = sld [smem:[#allocation0]]
  $region50: #{expert_forward.1} parent=0
    _
  %s10 = ssub.s32 1, %s8
  %s11 = scalar_select 0, %s10, %s8
  $region1: #{expert_forward.1} parent=0
    #allocation2 [shape = 'u8[131072]{0}', space=vmem, size = 0x20000, scoped, tag = 'input window, operand 1, single buffered']
    #allocation3 [shape = 's32[1]{0}', space=sflag, size = 0x4, scoped, tag = 'scoped memory for expert_forward.1']
    #allocation4 [shape = 's32[1]{0}', space=sflag, size = 0x4, scoped, tag = 'scoped memory for expert_forward.1']
    #allocation5 [shape = 'u8[131072]{0}', space=vmem, size = 0x20000, scoped, tag = 'input window, operand 3, single buffered']
    #allocation6 [shape = 's32[1]{0}', space=sflag, size = 0x4, scoped, tag = 'scoped memory for expert_forward.1']
    #allocation7 [shape = 'u8[131072]{0}', space=vmem, size = 0x20000, scoped, tag = 'input window, operand 5, single buffered']
    #allocation8 [shape = 'u8[8192]{0}', space=vmem, size = 0x2000, scoped, tag = 'output window, operand 0, single buffered']
    %12 = vsyncpa [#allocation3], 0
    %13 = vsyncpa [#allocation6], 0
    %14 = vsyncpa [#allocation4], 0
    // Predicated region
    $region2: #{expert_forward.1} parent=1 // pred_check
      _
    $region3: #{expert_forward.1} parent=1 // pred_check_branch
      %16 = sbr.rel (0) target = $region5
    $region4: #{expert_forward.1} parent=1 // pred_region
      _
    $region5: #{expert_forward.1} parent=1 // pred_fallthru
      _
    // Predicated region
    $region6: #{expert_forward.1} parent=1 // pred_check
      _
    $region7: #{expert_forward.1} parent=1 // pred_check_branch
      %18 = sbr.rel (0) target = $region9
    $region8: #{expert_forward.1} parent=1 // pred_region
      %s20 = ssub.s32 4096, 4096
      %21 = vsyncadd [#allocation3], %s20
      %s22 = sshll.u32 [#allocation2], 4
      %s23 = int_to_ptr.vmem [resolvable:$true] %s22
      %28 = dma.hbm_to_vmem [thread:$0]  %s1, 4096, %s23, [#allocation3], 256, 256, 16
    $region9: #{expert_forward.1} parent=1 // pred_fallthru
      _
    // Predicated region
    $region10: #{expert_forward.1} parent=1 // pred_check
      _
    $region11: #{expert_forward.1} parent=1 // pred_check_branch
      %30 = sbr.rel (0) target = $region13
    $region12: #{expert_forward.1} parent=1 // pred_region
      _
    $region13: #{expert_forward.1} parent=1 // pred_fallthru
      _
    // Predicated region
    $region14: #{expert_forward.1} parent=1 // pred_check
      _
    $region15: #{expert_forward.1} parent=1 // pred_check_branch
      %32 = sbr.rel (0) target = $region17
    $region16: #{expert_forward.1} parent=1 // pred_region
      %s34 = ssub.s32 4096, 4096
      %35 = vsyncadd [#allocation6], %s34
      %s36 = sshll.u32 [#allocation5], 4
      %s37 = int_to_ptr.vmem [resolvable:$true] %s36
      %42 = dma.hbm_to_vmem [thread:$0]  %s3, 4096, %s37, [#allocation6], 256, 256, 16
    $region17: #{expert_forward.1} parent=1 // pred_fallthru
      _
    // Predicated region
    $region18: #{expert_forward.1} parent=1 // pred_check
      _
    $region19: #{expert_forward.1} parent=1 // pred_check_branch
      %44 = sbr.rel (0) target = $region21
    $region20: #{expert_forward.1} parent=1 // pred_region
      _
    $region21: #{expert_forward.1} parent=1 // pred_fallthru
      _
    // Predicated region
    $region22: #{expert_forward.1} parent=1 // pred_check
      _
    $region23: #{expert_forward.1} parent=1 // pred_check_branch
      %46 = sbr.rel (0) target = $region25
    $region24: #{expert_forward.1} parent=1 // pred_region
      %s48 = ssub.s32 4096, 4096
      %49 = vsyncadd [#allocation6], %s48
      %s50 = sshll.u32 [#allocation7], 4
      %s51 = int_to_ptr.vmem [resolvable:$true] %s50
      %56 = dma.hbm_to_vmem [thread:$0]  %s5, 4096, %s51, [#allocation6], 64, 64, 4
    $region25: #{expert_forward.1} parent=1 // pred_fallthru
      _
    // Predicated region
    $region26: #{expert_forward.1} parent=1 // pred_check
      _
    $region27: #{expert_forward.1} parent=1 // pred_check_branch
      %58 = sbr.rel (0) target = $region29
    $region28: #{expert_forward.1} parent=1 // pred_region
      _
    $region29: #{expert_forward.1} parent=1 // pred_fallthru
      _
    // Predicated region
    $region30: #{expert_forward.1} parent=1 // pred_check
      _
    $region31: #{expert_forward.1} parent=1 // pred_check_branch
      %60 = sbr.rel (0) target = $region33
    $region32: #{expert_forward.1} parent=1 // pred_region
      %61 = dma.done [#allocation3], 4096
    $region33: #{expert_forward.1} parent=1 // pred_fallthru
      _
    // Predicated region
    $region34: #{expert_forward.1} parent=1 // pred_check
      _
    $region35: #{expert_forward.1} parent=1 // pred_check_branch
      %63 = sbr.rel (0) target = $region37
    $region36: #{expert_forward.1} parent=1 // pred_region
      %64 = dma.done [#allocation6], 4096
    $region37: #{expert_forward.1} parent=1 // pred_fallthru
      _
    // Predicated region
    $region38: #{expert_forward.1} parent=1 // pred_check
      _
    $region39: #{expert_forward.1} parent=1 // pred_check_branch
      %66 = sbr.rel (0) target = $region41
    $region40: #{expert_forward.1} parent=1 // pred_region
      %67 = dma.done [#allocation6], 4096
    $region41: #{expert_forward.1} parent=1 // pred_fallthru
      _
    %v69 = vld [vmem:[%s0] sm:$0xf]
    %v70 = vld [vmem:[%s0 + $0x4] sm:$0xf]
    %v71 = vld [vmem:[#allocation2] sm:$0xff]
    %v72 = vld [vmem:[#allocation2 + $0x8] sm:$0xff]
    %v73 = vld [vmem:[#allocation2 + $0x10] sm:$0xff]
    %v74 = vld [vmem:[#allocation2 + $0x18] sm:$0xff]
    %v75 = vld [vmem:[#allocation2 + $0x20] sm:$0xff]
    %v76 = vld [vmem:[#allocation2 + $0x28] sm:$0xff]
    %v77 = vld [vmem:[#allocation2 + $0x30] sm:$0xff]
    %v78 = vld [vmem:[#allocation2 + $0x38] sm:$0xff]
    %v79 = vld [vmem:[#allocation2 + $0x40] sm:$0xff]
    %v80 = vld [vmem:[#allocation2 + $0x48] sm:$0xff]
    %v81 = vld [vmem:[#allocation2 + $0x50] sm:$0xff]
    %v82 = vld [vmem:[#allocation2 + $0x58] sm:$0xff]
    %v83 = vld [vmem:[#allocation2 + $0x60] sm:$0xff]
    %v84 = vld [vmem:[#allocation2 + $0x68] sm:$0xff]
    %v85 = vld [vmem:[#allocation2 + $0x70] sm:$0xff]
    %v86 = vld [vmem:[#allocation2 + $0x78] sm:$0xff]
    %v87 = vld [vmem:[#allocation2 + $0x80] sm:$0xff]
    %v88 = vld [vmem:[#allocation2 + $0x88] sm:$0xff]
    %v89 = vld [vmem:[#allocation2 + $0x90] sm:$0xff]
    %v90 = vld [vmem:[#allocation2 + $0x98] sm:$0xff]
    %v91 = vld [vmem:[#allocation2 + $0xa0] sm:$0xff]
    %v92 = vld [vmem:[#allocation2 + $0xa8] sm:$0xff]
    %v93 = vld [vmem:[#allocation2 + $0xb0] sm:$0xff]
    %v94 = vld [vmem:[#allocation2 + $0xb8] sm:$0xff]
    %v95 = vld [vmem:[#allocation2 + $0xc0] sm:$0xff]
    %v96 = vld [vmem:[#allocation2 + $0xc8] sm:$0xff]
    %v97 = vld [vmem:[#allocation2 + $0xd0] sm:$0xff]
    %v98 = vld [vmem:[#allocation2 + $0xd8] sm:$0xff]
    %v99 = vld [vmem:[#allocation2 + $0xe0] sm:$0xff]
    %v100 = vld [vmem:[#allocation2 + $0xe8] sm:$0xff]
    %v101 = vld [vmem:[#allocation2 + $0xf0] sm:$0xff]
    %v102 = vld [vmem:[#allocation2 + $0xf8] sm:$0xff]
    %v103 = vld [vmem:[%s2] sm:$0xf]
    %v105 = vlaneseq
    %v106 = vshrl.u32 %v105, 7
    %v107 = vsub.s32 0, %v106
    %v108 = vrot.slane %v103, %v107
    %v109 = vlaneseq
    %v110 = vshrl.u32 %v109, 7
    %v111 = vsub.s32 1, %v110
    %v112 = vrot.slane %v103, %v111
    %v113 = vlaneseq
    %v114 = vshrl.u32 %v113, 7
    %v115 = vsub.s32 2, %v114
    %v116 = vrot.slane %v103, %v115
    %v117 = vlaneseq
    %v118 = vshrl.u32 %v117, 7
    %v119 = vsub.s32 3, %v118
    %v120 = vrot.slane %v103, %v119
    %v127 = vunpack.c.l.b16 %v69
    %v128 = vunpack.c.l.b16 %v70
    %v129 = vpack.c.b16 %v128, %v127
    %v163 = vunpack.c.l.b16 %v71
    %v164 = vunpack.c.h.b16 %v71
    %v165 = vunpack.c.l.b16 %v72
    %v166 = vunpack.c.h.b16 %v72
    %v167 = vunpack.c.l.b16 %v73
    %v168 = vunpack.c.h.b16 %v73
    %v169 = vunpack.c.l.b16 %v74
    %v170 = vunpack.c.h.b16 %v74
    %v171 = vunpack.c.l.b16 %v75
    %v172 = vunpack.c.h.b16 %v75
    %v173 = vunpack.c.l.b16 %v76
    %v174 = vunpack.c.h.b16 %v76
    %v175 = vunpack.c.l.b16 %v77
    %v176 = vunpack.c.h.b16 %v77
    %v177 = vunpack.c.l.b16 %v78
    %v178 = vunpack.c.h.b16 %v78
    %v179 = vunpack.c.l.b16 %v79
    %v180 = vunpack.c.h.b16 %v79
    %v181 = vunpack.c.l.b16 %v80
    %v182 = vunpack.c.h.b16 %v80
    %v183 = vunpack.c.l.b16 %v81
    %v184 = vunpack.c.h.b16 %v81
    %v185 = vunpack.c.l.b16 %v82
    %v186 = vunpack.c.h.b16 %v82
    %v187 = vunpack.c.l.b16 %v83
    %v188 = vunpack.c.h.b16 %v83
    %v189 = vunpack.c.l.b16 %v84
    %v190 = vunpack.c.h.b16 %v84
    %v191 = vunpack.c.l.b16 %v85
    %v192 = vunpack.c.h.b16 %v85
    %v193 = vunpack.c.l.b16 %v86
    %v194 = vunpack.c.h.b16 %v86
    %v195 = vunpack.c.l.b16 %v87
    %v196 = vunpack.c.h.b16 %v87
    %v197 = vunpack.c.l.b16 %v88
    %v198 = vunpack.c.h.b16 %v88
    %v199 = vunpack.c.l.b16 %v89
    %v200 = vunpack.c.h.b16 %v89
    %v201 = vunpack.c.l.b16 %v90
    %v202 = vunpack.c.h.b16 %v90
    %v203 = vunpack.c.l.b16 %v91
    %v204 = vunpack.c.h.b16 %v91
    %v205 = vunpack.c.l.b16 %v92
    %v206 = vunpack.c.h.b16 %v92
    %v207 = vunpack.c.l.b16 %v93
    %v208 = vunpack.c.h.b16 %v93
    %v209 = vunpack.c.l.b16 %v94
    %v210 = vunpack.c.h.b16 %v94
    %v211 = vunpack.c.l.b16 %v95
    %v212 = vunpack.c.h.b16 %v95
    %v213 = vunpack.c.l.b16 %v96
    %v214 = vunpack.c.h.b16 %v96
    %v215 = vunpack.c.l.b16 %v97
    %v216 = vunpack.c.h.b16 %v97
    %v217 = vunpack.c.l.b16 %v98
    %v218 = vunpack.c.h.b16 %v98
    %v219 = vunpack.c.l.b16 %v99
    %v220 = vunpack.c.h.b16 %v99
    %v221 = vunpack.c.l.b16 %v100
    %v222 = vunpack.c.h.b16 %v100
    %v223 = vunpack.c.l.b16 %v101
    %v224 = vunpack.c.h.b16 %v101
    %v225 = vunpack.c.l.b16 %v102
    %v226 = vunpack.c.h.b16 %v102
    %v227 = vpack.c.b16 %v167, %v163
    %v228 = vpack.c.b16 %v168, %v164
    %v229 = vpack.c.b16 %v169, %v165
    %v230 = vpack.c.b16 %v170, %v166
    %v231 = vpack.c.b16 %v175, %v171
    %v232 = vpack.c.b16 %v176, %v172
    %v233 = vpack.c.b16 %v177, %v173
    %v234 = vpack.c.b16 %v178, %v174
    %v235 = vpack.c.b16 %v183, %v179
    %v236 = vpack.c.b16 %v184, %v180
    %v237 = vpack.c.b16 %v185, %v181
    %v238 = vpack.c.b16 %v186, %v182
    %v239 = vpack.c.b16 %v191, %v187
    %v240 = vpack.c.b16 %v192, %v188
    %v241 = vpack.c.b16 %v193, %v189
    %v242 = vpack.c.b16 %v194, %v190
    %v243 = vpack.c.b16 %v199, %v195
    %v244 = vpack.c.b16 %v200, %v196
    %v245 = vpack.c.b16 %v201, %v197
    %v246 = vpack.c.b16 %v202, %v198
    %v247 = vpack.c.b16 %v207, %v203
    %v248 = vpack.c.b16 %v208, %v204
    %v249 = vpack.c.b16 %v209, %v205
    %v250 = vpack.c.b16 %v210, %v206
    %v251 = vpack.c.b16 %v215, %v211
    %v252 = vpack.c.b16 %v216, %v212
    %v253 = vpack.c.b16 %v217, %v213
    %v254 = vpack.c.b16 %v218, %v214
    %v255 = vpack.c.b16 %v223, %v219
    %v256 = vpack.c.b16 %v224, %v220
    %v257 = vpack.c.b16 %v225, %v221
    %v258 = vpack.c.b16 %v226, %v222
    %291 = vmatprep.subr.bf16.mxu0 %v228
    %292 = vmatpush1.bf16.msra.mxu0 %v227
    %293 = vmatprep.subr.bf16.mxu0 %v232
    %294 = vmatpush1.bf16.msra.mxu0 %v231
    %295 = vmatprep.subr.bf16.mxu0 %v236
    %296 = vmatpush1.bf16.msra.mxu0 %v235
    %297 = vmatprep.subr.bf16.mxu0 %v240
    %298 = vmatpush1.bf16.msra.mxu0 %v239
    %299 = vmatprep.subr.bf16.mxu0 %v244
    %300 = vmatpush1.bf16.msra.mxu0 %v243
    %301 = vmatprep.subr.bf16.mxu0 %v248
    %302 = vmatpush1.bf16.msra.mxu0 %v247
    %303 = vmatprep.subr.bf16.mxu0 %v252
    %304 = vmatpush1.bf16.msra.mxu0 %v251
    %305 = vmatprep.subr.bf16.mxu0 %v256
    %306 = vmatpush1.bf16.msra.mxu0 %v255
    %307 = vmatprep.subr.bf16.mxu0 0
    %308 = vmatpush1.bf16.msra.mxu0 0
    %309 = vmatprep.subr.bf16.mxu0 0
    %310 = vmatpush1.bf16.msra.mxu0 0
    %311 = vmatprep.subr.bf16.mxu0 0
    %312 = vmatpush1.bf16.msra.mxu0 0
    %313 = vmatprep.subr.bf16.mxu0 0
    %314 = vmatpush1.bf16.msra.mxu0 0
    %315 = vmatprep.subr.bf16.mxu0 0
    %316 = vmatpush1.bf16.msra.mxu0 0
    %317 = vmatprep.subr.bf16.mxu0 0
    %318 = vmatpush1.bf16.msra.mxu0 0
    %319 = vmatprep.subr.bf16.mxu0 0
    %320 = vmatpush1.bf16.msra.mxu0 0
    %321 = vmatprep.subr.bf16.mxu0 0
    %322 = vmatpush1.bf16.msra.mxu0 0
    %323 = vmatprep.mubr.bf16.mxu0 0
    %324 = vmatmul.mubr.bf16.gmra.mrb[0].mxu0 %v129
    %v325 = vpop.f32.mrb[0].mxu0
    %v326 = vadd.f32 %v108, %v325
    %v327 = vpop.f32.mrb[0].mxu0
    %v328 = vadd.f32 %v112, %v327
    %v329 = vpop.f32.mrb[0].mxu0
    %v330 = vadd.f32 %v108, %v329
    %v331 = vpop.f32.mrb[0].mxu0
    %v332 = vadd.f32 %v112, %v331
    %333 = vdwg.mxu0
    %334 = vmatprep.subr.bf16.mxu0 %v230
    %335 = vmatpush1.bf16.msra.mxu0 %v229
    %336 = vmatprep.subr.bf16.mxu0 %v234
    %337 = vmatpush1.bf16.msra.mxu0 %v233
    %338 = vmatprep.subr.bf16.mxu0 %v238
    %339 = vmatpush1.bf16.msra.mxu0 %v237
    %340 = vmatprep.subr.bf16.mxu0 %v242
    %341 = vmatpush1.bf16.msra.mxu0 %v241
    %342 = vmatprep.subr.bf16.mxu0 %v246
    %343 = vmatpush1.bf16.msra.mxu0 %v245
    %344 = vmatprep.subr.bf16.mxu0 %v250
    %345 = vmatpush1.bf16.msra.mxu0 %v249
    %346 = vmatprep.subr.bf16.mxu0 %v254
    %347 = vmatpush1.bf16.msra.mxu0 %v253
    %348 = vmatprep.subr.bf16.mxu0 %v258
    %349 = vmatpush1.bf16.msra.mxu0 %v257
    %350 = vmatprep.subr.bf16.mxu0 0
    %351 = vmatpush1.bf16.msra.mxu0 0
    %352 = vmatprep.subr.bf16.mxu0 0
    %353 = vmatpush1.bf16.msra.mxu0 0
    %354 = vmatprep.subr.bf16.mxu0 0
    %355 = vmatpush1.bf16.msra.mxu0 0
    %356 = vmatprep.subr.bf16.mxu0 0
    %357 = vmatpush1.bf16.msra.mxu0 0
    %358 = vmatprep.subr.bf16.mxu0 0
    %359 = vmatpush1.bf16.msra.mxu0 0
    %360 = vmatprep.subr.bf16.mxu0 0
    %361 = vmatpush1.bf16.msra.mxu0 0
    %362 = vmatprep.subr.bf16.mxu0 0
    %363 = vmatpush1.bf16.msra.mxu0 0
    %364 = vmatprep.subr.bf16.mxu0 0
    %365 = vmatpush1.bf16.msra.mxu0 0
    %366 = vmatprep.mubr.bf16.mxu0 0
    %367 = vmatmul.mubr.bf16.gmra.mrb[0].mxu0 %v129
    %v368 = vpop.f32.mrb[0].mxu0
    %v369 = vadd.f32 %v116, %v368
    %v370 = vpop.f32.mrb[0].mxu0
    %v371 = vadd.f32 %v120, %v370
    %v372 = vpop.f32.mrb[0].mxu0
    %v373 = vadd.f32 %v116, %v372
    %v374 = vpop.f32.mrb[0].mxu0
    %v375 = vadd.f32 %v120, %v374
    %376 = vdwg.mxu0
    %v377 = vld [vmem:[#allocation5] sm:$0xff]
    %v378 = vld [vmem:[#allocation5 + $0x8] sm:$0xff]
    %v379 = vld [vmem:[#allocation5 + $0x10] sm:$0xff]
    %v380 = vld [vmem:[#allocation5 + $0x18] sm:$0xff]
    %v381 = vld [vmem:[#allocation5 + $0x20] sm:$0xff]
    %v382 = vld [vmem:[#allocation5 + $0x28] sm:$0xff]
    %v383 = vld [vmem:[#allocation5 + $0x30] sm:$0xff]
    %v384 = vld [vmem:[#allocation5 + $0x38] sm:$0xff]
    %v385 = vld [vmem:[#allocation5 + $0x40] sm:$0xff]
    %v386 = vld [vmem:[#allocation5 + $0x48] sm:$0xff]
    %v387 = vld [vmem:[#allocation5 + $0x50] sm:$0xff]
    %v388 = vld [vmem:[#allocation5 + $0x58] sm:$0xff]
    %v389 = vld [vmem:[#allocation5 + $0x60] sm:$0xff]
    %v390 = vld [vmem:[#allocation5 + $0x68] sm:$0xff]
    %v391 = vld [vmem:[#allocation5 + $0x70] sm:$0xff]
    %v392 = vld [vmem:[#allocation5 + $0x78] sm:$0xff]
    %v393 = vld [vmem:[#allocation5 + $0x80] sm:$0xff]
    %v394 = vld [vmem:[#allocation5 + $0x88] sm:$0xff]
    %v395 = vld [vmem:[#allocation5 + $0x90] sm:$0xff]
    %v396 = vld [vmem:[#allocation5 + $0x98] sm:$0xff]
    %v397 = vld [vmem:[#allocation5 + $0xa0] sm:$0xff]
    %v398 = vld [vmem:[#allocation5 + $0xa8] sm:$0xff]
    %v399 = vld [vmem:[#allocation5 + $0xb0] sm:$0xff]
    %v400 = vld [vmem:[#allocation5 + $0xb8] sm:$0xff]
    %v401 = vld [vmem:[#allocation5 + $0xc0] sm:$0xff]
    %v402 = vld [vmem:[#allocation5 + $0xc8] sm:$0xff]
    %v403 = vld [vmem:[#allocation5 + $0xd0] sm:$0xff]
    %v404 = vld [vmem:[#allocation5 + $0xd8] sm:$0xff]
    %v405 = vld [vmem:[#allocation5 + $0xe0] sm:$0xff]
    %v406 = vld [vmem:[#allocation5 + $0xe8] sm:$0xff]
    %v407 = vld [vmem:[#allocation5 + $0xf0] sm:$0xff]
    %v408 = vld [vmem:[#allocation5 + $0xf8] sm:$0xff]
    %v409 = vld [vmem:[%s4] sm:$0xf]
    %v411 = vlaneseq
    %v412 = vshrl.u32 %v411, 7
    %v413 = vsub.s32 0, %v412
    %v414 = vrot.slane %v409, %v413
    %v415 = vlaneseq
    %v416 = vshrl.u32 %v415, 7
    %v417 = vsub.s32 1, %v416
    %v418 = vrot.slane %v409, %v417
    %v419 = vlaneseq
    %v420 = vshrl.u32 %v419, 7
    %v421 = vsub.s32 2, %v420
    %v422 = vrot.slane %v409, %v421
    %v423 = vlaneseq
    %v424 = vshrl.u32 %v423, 7
    %v425 = vsub.s32 3, %v424
    %v426 = vrot.slane %v409, %v425
    %v463 = vunpack.c.l.b16 %v377
    %v464 = vunpack.c.h.b16 %v377
    %v465 = vunpack.c.l.b16 %v378
    %v466 = vunpack.c.h.b16 %v378
    %v467 = vunpack.c.l.b16 %v379
    %v468 = vunpack.c.h.b16 %v379
    %v469 = vunpack.c.l.b16 %v380
    %v470 = vunpack.c.h.b16 %v380
    %v471 = vunpack.c.l.b16 %v381
    %v472 = vunpack.c.h.b16 %v381
    %v473 = vunpack.c.l.b16 %v382
    %v474 = vunpack.c.h.b16 %v382
    %v475 = vunpack.c.l.b16 %v383
    %v476 = vunpack.c.h.b16 %v383
    %v477 = vunpack.c.l.b16 %v384
    %v478 = vunpack.c.h.b16 %v384
    %v479 = vunpack.c.l.b16 %v385
    %v480 = vunpack.c.h.b16 %v385
    %v481 = vunpack.c.l.b16 %v386
    %v482 = vunpack.c.h.b16 %v386
    %v483 = vunpack.c.l.b16 %v387
    %v484 = vunpack.c.h.b16 %v387
    %v485 = vunpack.c.l.b16 %v388
    %v486 = vunpack.c.h.b16 %v388
    %v487 = vunpack.c.l.b16 %v389
    %v488 = vunpack.c.h.b16 %v389
    %v489 = vunpack.c.l.b16 %v390
    %v490 = vunpack.c.h.b16 %v390
    %v491 = vunpack.c.l.b16 %v391
    %v492 = vunpack.c.h.b16 %v391
    %v493 = vunpack.c.l.b16 %v392
    %v494 = vunpack.c.h.b16 %v392
    %v495 = vunpack.c.l.b16 %v393
    %v496 = vunpack.c.h.b16 %v393
    %v497 = vunpack.c.l.b16 %v394
    %v498 = vunpack.c.h.b16 %v394
    %v499 = vunpack.c.l.b16 %v395
    %v500 = vunpack.c.h.b16 %v395
    %v501 = vunpack.c.l.b16 %v396
    %v502 = vunpack.c.h.b16 %v396
    %v503 = vunpack.c.l.b16 %v397
    %v504 = vunpack.c.h.b16 %v397
    %v505 = vunpack.c.l.b16 %v398
    %v506 = vunpack.c.h.b16 %v398
    %v507 = vunpack.c.l.b16 %v399
    %v508 = vunpack.c.h.b16 %v399
    %v509 = vunpack.c.l.b16 %v400
    %v510 = vunpack.c.h.b16 %v400
    %v511 = vunpack.c.l.b16 %v401
    %v512 = vunpack.c.h.b16 %v401
    %v513 = vunpack.c.l.b16 %v402
    %v514 = vunpack.c.h.b16 %v402
    %v515 = vunpack.c.l.b16 %v403
    %v516 = vunpack.c.h.b16 %v403
    %v517 = vunpack.c.l.b16 %v404
    %v518 = vunpack.c.h.b16 %v404
    %v519 = vunpack.c.l.b16 %v405
    %v520 = vunpack.c.h.b16 %v405
    %v521 = vunpack.c.l.b16 %v406
    %v522 = vunpack.c.h.b16 %v406
    %v523 = vunpack.c.l.b16 %v407
    %v524 = vunpack.c.h.b16 %v407
    %v525 = vunpack.c.l.b16 %v408
    %v526 = vunpack.c.h.b16 %v408
    %v527 = vpack.c.b16 %v467, %v463
    %v528 = vpack.c.b16 %v468, %v464
    %v529 = vpack.c.b16 %v469, %v465
    %v530 = vpack.c.b16 %v470, %v466
    %v531 = vpack.c.b16 %v475, %v471
    %v532 = vpack.c.b16 %v476, %v472
    %v533 = vpack.c.b16 %v477, %v473
    %v534 = vpack.c.b16 %v478, %v474
    %v535 = vpack.c.b16 %v483, %v479
    %v536 = vpack.c.b16 %v484, %v480
    %v537 = vpack.c.b16 %v485, %v481
    %v538 = vpack.c.b16 %v486, %v482
    %v539 = vpack.c.b16 %v491, %v487
    %v540 = vpack.c.b16 %v492, %v488
    %v541 = vpack.c.b16 %v493, %v489
    %v542 = vpack.c.b16 %v494, %v490
    %v543 = vpack.c.b16 %v499, %v495
    %v544 = vpack.c.b16 %v500, %v496
    %v545 = vpack.c.b16 %v501, %v497
    %v546 = vpack.c.b16 %v502, %v498
    %v547 = vpack.c.b16 %v507, %v503
    %v548 = vpack.c.b16 %v508, %v504
    %v549 = vpack.c.b16 %v509, %v505
    %v550 = vpack.c.b16 %v510, %v506
    %v551 = vpack.c.b16 %v515, %v511
    %v552 = vpack.c.b16 %v516, %v512
    %v553 = vpack.c.b16 %v517, %v513
    %v554 = vpack.c.b16 %v518, %v514
    %v555 = vpack.c.b16 %v523, %v519
    %v556 = vpack.c.b16 %v524, %v520
    %v557 = vpack.c.b16 %v525, %v521
    %v558 = vpack.c.b16 %v526, %v522
    %591 = vmatprep.subr.bf16.mxu0 %v528
    %592 = vmatpush1.bf16.msra.mxu0 %v527
    %593 = vmatprep.subr.bf16.mxu0 %v532
    %594 = vmatpush1.bf16.msra.mxu0 %v531
    %595 = vmatprep.subr.bf16.mxu0 %v536
    %596 = vmatpush1.bf16.msra.mxu0 %v535
    %597 = vmatprep.subr.bf16.mxu0 %v540
    %598 = vmatpush1.bf16.msra.mxu0 %v539
    %599 = vmatprep.subr.bf16.mxu0 %v544
    %600 = vmatpush1.bf16.msra.mxu0 %v543
    %601 = vmatprep.subr.bf16.mxu0 %v548
    %602 = vmatpush1.bf16.msra.mxu0 %v547
    %603 = vmatprep.subr.bf16.mxu0 %v552
    %604 = vmatpush1.bf16.msra.mxu0 %v551
    %605 = vmatprep.subr.bf16.mxu0 %v556
    %606 = vmatpush1.bf16.msra.mxu0 %v555
    %607 = vmatprep.subr.bf16.mxu0 0
    %608 = vmatpush1.bf16.msra.mxu0 0
    %609 = vmatprep.subr.bf16.mxu0 0
    %610 = vmatpush1.bf16.msra.mxu0 0
    %611 = vmatprep.subr.bf16.mxu0 0
    %612 = vmatpush1.bf16.msra.mxu0 0
    %613 = vmatprep.subr.bf16.mxu0 0
    %614 = vmatpush1.bf16.msra.mxu0 0
    %615 = vmatprep.subr.bf16.mxu0 0
    %616 = vmatpush1.bf16.msra.mxu0 0
    %617 = vmatprep.subr.bf16.mxu0 0
    %618 = vmatpush1.bf16.msra.mxu0 0
    %619 = vmatprep.subr.bf16.mxu0 0
    %620 = vmatpush1.bf16.msra.mxu0 0
    %621 = vmatprep.subr.bf16.mxu0 0
    %622 = vmatpush1.bf16.msra.mxu0 0
    %623 = vmatprep.mubr.bf16.mxu0 0
    %624 = vmatmul.mubr.bf16.gmra.mrb[0].mxu0 %v129
    %v625 = vpop.f32.mrb[0].mxu0
    %v626 = vadd.f32 %v414, %v625
    %v627 = vpop.f32.mrb[0].mxu0
    %v628 = vadd.f32 %v418, %v627
    %v629 = vpop.f32.mrb[0].mxu0
    %v630 = vadd.f32 %v414, %v629
    %v631 = vpop.f32.mrb[0].mxu0
    %v632 = vadd.f32 %v418, %v631
    %633 = vdwg.mxu0
    %634 = vmatprep.subr.bf16.mxu0 %v530
    %635 = vmatpush1.bf16.msra.mxu0 %v529
    %636 = vmatprep.subr.bf16.mxu0 %v534
    %637 = vmatpush1.bf16.msra.mxu0 %v533
    %638 = vmatprep.subr.bf16.mxu0 %v538
    %639 = vmatpush1.bf16.msra.mxu0 %v537
    %640 = vmatprep.subr.bf16.mxu0 %v542
    %641 = vmatpush1.bf16.msra.mxu0 %v541
    %642 = vmatprep.subr.bf16.mxu0 %v546
    %643 = vmatpush1.bf16.msra.mxu0 %v545
    %644 = vmatprep.subr.bf16.mxu0 %v550
    %645 = vmatpush1.bf16.msra.mxu0 %v549
    %646 = vmatprep.subr.bf16.mxu0 %v554
    %647 = vmatpush1.bf16.msra.mxu0 %v553
    %648 = vmatprep.subr.bf16.mxu0 %v558
    %649 = vmatpush1.bf16.msra.mxu0 %v557
    %650 = vmatprep.subr.bf16.mxu0 0
    %651 = vmatpush1.bf16.msra.mxu0 0
    %652 = vmatprep.subr.bf16.mxu0 0
    %653 = vmatpush1.bf16.msra.mxu0 0
    %654 = vmatprep.subr.bf16.mxu0 0
    %655 = vmatpush1.bf16.msra.mxu0 0
    %656 = vmatprep.subr.bf16.mxu0 0
    %657 = vmatpush1.bf16.msra.mxu0 0
    %658 = vmatprep.subr.bf16.mxu0 0
    %659 = vmatpush1.bf16.msra.mxu0 0
    %660 = vmatprep.subr.bf16.mxu0 0
    %661 = vmatpush1.bf16.msra.mxu0 0
    %662 = vmatprep.subr.bf16.mxu0 0
    %663 = vmatpush1.bf16.msra.mxu0 0
    %664 = vmatprep.subr.bf16.mxu0 0
    %665 = vmatpush1.bf16.msra.mxu0 0
    %666 = vmatprep.mubr.bf16.mxu0 0
    %667 = vmatmul.mubr.bf16.gmra.mrb[0].mxu0 %v129
    %v668 = vpop.f32.mrb[0].mxu0
    %v669 = vadd.f32 %v422, %v668
    %v670 = vpop.f32.mrb[0].mxu0
    %v671 = vadd.f32 %v426, %v670
    %v672 = vpop.f32.mrb[0].mxu0
    %v673 = vadd.f32 %v422, %v672
    %v674 = vpop.f32.mrb[0].mxu0
    %v675 = vadd.f32 %v426, %v674
    %676 = vdwg.mxu0
    %v677 = vxor.u32 %v326, 2147483648
    %v678 = vxor.u32 %v328, 2147483648
    %v679 = vxor.u32 %v369, 2147483648
    %v680 = vxor.u32 %v371, 2147483648
    %v681 = vxor.u32 %v330, 2147483648
    %v682 = vxor.u32 %v332, 2147483648
    %v683 = vxor.u32 %v373, 2147483648
    %v684 = vxor.u32 %v375, 2147483648
    %v685 = vmul.f32 %v677, 1.442695
    %v686 = vpow.pop %v685
    %v687 = vmul.f32 %v678, 1.442695
    %v688 = vpow.pop %v687
    %v689 = vmul.f32 %v679, 1.442695
    %v690 = vpow.pop %v689
    %v691 = vmul.f32 %v680, 1.442695
    %v692 = vpow.pop %v691
    %v693 = vmul.f32 %v681, 1.442695
    %v694 = vpow.pop %v693
    %v695 = vmul.f32 %v682, 1.442695
    %v696 = vpow.pop %v695
    %v697 = vmul.f32 %v683, 1.442695
    %v698 = vpow.pop %v697
    %v699 = vmul.f32 %v684, 1.442695
    %v700 = vpow.pop %v699
    %v701 = vadd.f32 %v686, 1.0
    %v702 = vadd.f32 %v688, 1.0
    %v703 = vadd.f32 %v690, 1.0
    %v704 = vadd.f32 %v692, 1.0
    %v705 = vadd.f32 %v694, 1.0
    %v706 = vadd.f32 %v696, 1.0
    %v707 = vadd.f32 %v698, 1.0
    %v708 = vadd.f32 %v700, 1.0
    %v709 = vrcp.pop %v701
    %v710 = vmul.f32 1.0, %v709
    %v711 = vrcp.pop %v702
    %v712 = vmul.f32 1.0, %v711
    %v713 = vrcp.pop %v703
    %v714 = vmul.f32 1.0, %v713
    %v715 = vrcp.pop %v704
    %v716 = vmul.f32 1.0, %v715
    %v717 = vrcp.pop %v705
    %v718 = vmul.f32 1.0, %v717
    %v719 = vrcp.pop %v706
    %v720 = vmul.f32 1.0, %v719
    %v721 = vrcp.pop %v707
    %v722 = vmul.f32 1.0, %v721
    %v723 = vrcp.pop %v708
    %v724 = vmul.f32 1.0, %v723
    %v725 = vmul.f32 %v326, %v710
    %v726 = vmul.f32 %v328, %v712
    %v727 = vmul.f32 %v369, %v714
    %v728 = vmul.f32 %v371, %v716
    %v729 = vmul.f32 %v330, %v718
    %v730 = vmul.f32 %v332, %v720
    %v731 = vmul.f32 %v373, %v722
    %v732 = vmul.f32 %v375, %v724
    %v733 = vmul.f32 %v725, %v626
    %v734 = vmul.f32 %v726, %v628
    %v735 = vmul.f32 %v727, %v669
    %v736 = vmul.f32 %v728, %v671
    %v737 = vmul.f32 %v729, %v630
    %v738 = vmul.f32 %v730, %v632
    %v739 = vmul.f32 %v731, %v673
    %v740 = vmul.f32 %v732, %v675
    %v741 = vpack.c.bf16 %v737, %v733
    %v742 = vpack.c.bf16 %v738, %v734
    %v743 = vpack.c.bf16 %v739, %v735
    %v744 = vpack.c.bf16 %v740, %v736
    %v745 = vld [vmem:[#allocation7] sm:$0xf]
    %v746 = vld [vmem:[#allocation7 + $0x4] sm:$0xf]
    %v747 = vld [vmem:[#allocation7 + $0x8] sm:$0xf]
    %v748 = vld [vmem:[#allocation7 + $0xc] sm:$0xf]
    %v749 = vld [vmem:[#allocation7 + $0x10] sm:$0xf]
    %v750 = vld [vmem:[#allocation7 + $0x14] sm:$0xf]
    %v751 = vld [vmem:[#allocation7 + $0x18] sm:$0xf]
    %v752 = vld [vmem:[#allocation7 + $0x1c] sm:$0xf]
    %v753 = vld [vmem:[#allocation7 + $0x20] sm:$0xf]
    %v754 = vld [vmem:[#allocation7 + $0x24] sm:$0xf]
    %v755 = vld [vmem:[#allocation7 + $0x28] sm:$0xf]
    %v756 = vld [vmem:[#allocation7 + $0x2c] sm:$0xf]
    %v757 = vld [vmem:[#allocation7 + $0x30] sm:$0xf]
    %v758 = vld [vmem:[#allocation7 + $0x34] sm:$0xf]
    %v759 = vld [vmem:[#allocation7 + $0x38] sm:$0xf]
    %v760 = vld [vmem:[#allocation7 + $0x3c] sm:$0xf]
    %v761 = vld [vmem:[#allocation7 + $0x40] sm:$0xf]
    %v762 = vld [vmem:[#allocation7 + $0x44] sm:$0xf]
    %v763 = vld [vmem:[#allocation7 + $0x48] sm:$0xf]
    %v764 = vld [vmem:[#allocation7 + $0x4c] sm:$0xf]
    %v765 = vld [vmem:[#allocation7 + $0x50] sm:$0xf]
    %v766 = vld [vmem:[#allocation7 + $0x54] sm:$0xf]
    %v767 = vld [vmem:[#allocation7 + $0x58] sm:$0xf]
    %v768 = vld [vmem:[#allocation7 + $0x5c] sm:$0xf]
    %v769 = vld [vmem:[#allocation7 + $0x60] sm:$0xf]
    %v770 = vld [vmem:[#allocation7 + $0x64] sm:$0xf]
    %v771 = vld [vmem:[#allocation7 + $0x68] sm:$0xf]
    %v772 = vld [vmem:[#allocation7 + $0x6c] sm:$0xf]
    %v773 = vld [vmem:[#allocation7 + $0x70] sm:$0xf]
    %v774 = vld [vmem:[#allocation7 + $0x74] sm:$0xf]
    %v775 = vld [vmem:[#allocation7 + $0x78] sm:$0xf]
    %v776 = vld [vmem:[#allocation7 + $0x7c] sm:$0xf]
    %v777 = vld [vmem:[#allocation7 + $0x80] sm:$0xf]
    %v778 = vld [vmem:[#allocation7 + $0x84] sm:$0xf]
    %v779 = vld [vmem:[#allocation7 + $0x88] sm:$0xf]
    %v780 = vld [vmem:[#allocation7 + $0x8c] sm:$0xf]
    %v781 = vld [vmem:[#allocation7 + $0x90] sm:$0xf]
    %v782 = vld [vmem:[#allocation7 + $0x94] sm:$0xf]
    %v783 = vld [vmem:[#allocation7 + $0x98] sm:$0xf]
    %v784 = vld [vmem:[#allocation7 + $0x9c] sm:$0xf]
    %v785 = vld [vmem:[#allocation7 + $0xa0] sm:$0xf]
    %v786 = vld [vmem:[#allocation7 + $0xa4] sm:$0xf]
    %v787 = vld [vmem:[#allocation7 + $0xa8] sm:$0xf]
    %v788 = vld [vmem:[#allocation7 + $0xac] sm:$0xf]
    %v789 = vld [vmem:[#allocation7 + $0xb0] sm:$0xf]
    %v790 = vld [vmem:[#allocation7 + $0xb4] sm:$0xf]
    %v791 = vld [vmem:[#allocation7 + $0xb8] sm:$0xf]
    %v792 = vld [vmem:[#allocation7 + $0xbc] sm:$0xf]
    %v793 = vld [vmem:[#allocation7 + $0xc0] sm:$0xf]
    %v794 = vld [vmem:[#allocation7 + $0xc4] sm:$0xf]
    %v795 = vld [vmem:[#allocation7 + $0xc8] sm:$0xf]
    %v796 = vld [vmem:[#allocation7 + $0xcc] sm:$0xf]
    %v797 = vld [vmem:[#allocation7 + $0xd0] sm:$0xf]
    %v798 = vld [vmem:[#allocation7 + $0xd4] sm:$0xf]
    %v799 = vld [vmem:[#allocation7 + $0xd8] sm:$0xf]
    %v800 = vld [vmem:[#allocation7 + $0xdc] sm:$0xf]
    %v801 = vld [vmem:[#allocation7 + $0xe0] sm:$0xf]
    %v802 = vld [vmem:[#allocation7 + $0xe4] sm:$0xf]
    %v803 = vld [vmem:[#allocation7 + $0xe8] sm:$0xf]
    %v804 = vld [vmem:[#allocation7 + $0xec] sm:$0xf]
    %v805 = vld [vmem:[#allocation7 + $0xf0] sm:$0xf]
    %v806 = vld [vmem:[#allocation7 + $0xf4] sm:$0xf]
    %v807 = vld [vmem:[#allocation7 + $0xf8] sm:$0xf]
    %v808 = vld [vmem:[#allocation7 + $0xfc] sm:$0xf]
    %v809 = vld [vmem:[%s6] sm:$0x1]
    %v811 = vlaneseq
    %v812 = vshrl.u32 %v811, 7
    %v813 = vsub.s32 0, %v812
    %v814 = vrot.slane %v809, %v813
    %v880 = vunpack.c.l.b16 %v745
    %v881 = vunpack.c.l.b16 %v746
    %v882 = vunpack.c.l.b16 %v747
    %v883 = vunpack.c.l.b16 %v748
    %v884 = vunpack.c.l.b16 %v749
    %v885 = vunpack.c.l.b16 %v750
    %v886 = vunpack.c.l.b16 %v751
    %v887 = vunpack.c.l.b16 %v752
    %v888 = vunpack.c.l.b16 %v753
    %v889 = vunpack.c.l.b16 %v754
    %v890 = vunpack.c.l.b16 %v755
    %v891 = vunpack.c.l.b16 %v756
    %v892 = vunpack.c.l.b16 %v757
    %v893 = vunpack.c.l.b16 %v758
    %v894 = vunpack.c.l.b16 %v759
    %v895 = vunpack.c.l.b16 %v760
    %v896 = vunpack.c.l.b16 %v761
    %v897 = vunpack.c.l.b16 %v762
    %v898 = vunpack.c.l.b16 %v763
    %v899 = vunpack.c.l.b16 %v764
    %v900 = vunpack.c.l.b16 %v765
    %v901 = vunpack.c.l.b16 %v766
    %v902 = vunpack.c.l.b16 %v767
    %v903 = vunpack.c.l.b16 %v768
    %v904 = vunpack.c.l.b16 %v769
    %v905 = vunpack.c.l.b16 %v770
    %v906 = vunpack.c.l.b16 %v771
    %v907 = vunpack.c.l.b16 %v772
    %v908 = vunpack.c.l.b16 %v773
    %v909 = vunpack.c.l.b16 %v774
    %v910 = vunpack.c.l.b16 %v775
    %v911 = vunpack.c.l.b16 %v776
    %v912 = vunpack.c.l.b16 %v777
    %v913 = vunpack.c.l.b16 %v778
    %v914 = vunpack.c.l.b16 %v779
    %v915 = vunpack.c.l.b16 %v780
    %v916 = vunpack.c.l.b16 %v781
    %v917 = vunpack.c.l.b16 %v782
    %v918 = vunpack.c.l.b16 %v783
    %v919 = vunpack.c.l.b16 %v784
    %v920 = vunpack.c.l.b16 %v785
    %v921 = vunpack.c.l.b16 %v786
    %v922 = vunpack.c.l.b16 %v787
    %v923 = vunpack.c.l.b16 %v788
    %v924 = vunpack.c.l.b16 %v789
    %v925 = vunpack.c.l.b16 %v790
    %v926 = vunpack.c.l.b16 %v791
    %v927 = vunpack.c.l.b16 %v792
    %v928 = vunpack.c.l.b16 %v793
    %v929 = vunpack.c.l.b16 %v794
    %v930 = vunpack.c.l.b16 %v795
    %v931 = vunpack.c.l.b16 %v796
    %v932 = vunpack.c.l.b16 %v797
    %v933 = vunpack.c.l.b16 %v798
    %v934 = vunpack.c.l.b16 %v799
    %v935 = vunpack.c.l.b16 %v800
    %v936 = vunpack.c.l.b16 %v801
    %v937 = vunpack.c.l.b16 %v802
    %v938 = vunpack.c.l.b16 %v803
    %v939 = vunpack.c.l.b16 %v804
    %v940 = vunpack.c.l.b16 %v805
    %v941 = vunpack.c.l.b16 %v806
    %v942 = vunpack.c.l.b16 %v807
    %v943 = vunpack.c.l.b16 %v808
    %v944 = vpack.c.b16 %v881, %v880
    %v945 = vpack.c.b16 %v883, %v882
    %v946 = vpack.c.b16 %v885, %v884
    %v947 = vpack.c.b16 %v887, %v886
    %v948 = vpack.c.b16 %v889, %v888
    %v949 = vpack.c.b16 %v891, %v890
    %v950 = vpack.c.b16 %v893, %v892
    %v951 = vpack.c.b16 %v895, %v894
    %v952 = vpack.c.b16 %v897, %v896
    %v953 = vpack.c.b16 %v899, %v898
    %v954 = vpack.c.b16 %v901, %v900
    %v955 = vpack.c.b16 %v903, %v902
    %v956 = vpack.c.b16 %v905, %v904
    %v957 = vpack.c.b16 %v907, %v906
    %v958 = vpack.c.b16 %v909, %v908
    %v959 = vpack.c.b16 %v911, %v910
    %v960 = vpack.c.b16 %v913, %v912
    %v961 = vpack.c.b16 %v915, %v914
    %v962 = vpack.c.b16 %v917, %v916
    %v963 = vpack.c.b16 %v919, %v918
    %v964 = vpack.c.b16 %v921, %v920
    %v965 = vpack.c.b16 %v923, %v922
    %v966 = vpack.c.b16 %v925, %v924
    %v967 = vpack.c.b16 %v927, %v926
    %v968 = vpack.c.b16 %v929, %v928
    %v969 = vpack.c.b16 %v931, %v930
    %v970 = vpack.c.b16 %v933, %v932
    %v971 = vpack.c.b16 %v935, %v934
    %v972 = vpack.c.b16 %v937, %v936
    %v973 = vpack.c.b16 %v939, %v938
    %v974 = vpack.c.b16 %v941, %v940
    %v975 = vpack.c.b16 %v943, %v942
    %1008 = vmatprep.subr.bf16.mxu0 0
    %1009 = vmatpush1.bf16.msra.mxu0 %v944
    %1010 = vmatprep.subr.bf16.mxu0 0
    %1011 = vmatpush1.bf16.msra.mxu0 %v945
    %1012 = vmatprep.subr.bf16.mxu0 0
    %1013 = vmatpush1.bf16.msra.mxu0 %v946
    %1014 = vmatprep.subr.bf16.mxu0 0
    %1015 = vmatpush1.bf16.msra.mxu0 %v947
    %1016 = vmatprep.subr.bf16.mxu0 0
    %1017 = vmatpush1.bf16.msra.mxu0 %v948
    %1018 = vmatprep.subr.bf16.mxu0 0
    %1019 = vmatpush1.bf16.msra.mxu0 %v949
    %1020 = vmatprep.subr.bf16.mxu0 0
    %1021 = vmatpush1.bf16.msra.mxu0 %v950
    %1022 = vmatprep.subr.bf16.mxu0 0
    %1023 = vmatpush1.bf16.msra.mxu0 %v951
    %1024 = vmatprep.subr.bf16.mxu0 0
    %1025 = vmatpush1.bf16.msra.mxu0 %v952
    %1026 = vmatprep.subr.bf16.mxu0 0
    %1027 = vmatpush1.bf16.msra.mxu0 %v953
    %1028 = vmatprep.subr.bf16.mxu0 0
    %1029 = vmatpush1.bf16.msra.mxu0 %v954
    %1030 = vmatprep.subr.bf16.mxu0 0
    %1031 = vmatpush1.bf16.msra.mxu0 %v955
    %1032 = vmatprep.subr.bf16.mxu0 0
    %1033 = vmatpush1.bf16.msra.mxu0 %v956
    %1034 = vmatprep.subr.bf16.mxu0 0
    %1035 = vmatpush1.bf16.msra.mxu0 %v957
    %1036 = vmatprep.subr.bf16.mxu0 0
    %1037 = vmatpush1.bf16.msra.mxu0 %v958
    %1038 = vmatprep.subr.bf16.mxu0 0
    %1039 = vmatpush1.bf16.msra.mxu0 %v959
    %1040 = vmatprep.mubr.bf16.mxu0 %v742
    %1041 = vmatmul.mubr.bf16.gmra.mrb[0].mxu0 %v741
    %v1042 = vpop.f32.mrb[0].mxu0
    %v1043 = vadd.f32 %v814, %v1042
    %v1044 = vpop.f32.mrb[0].mxu0
    %v1045 = vpop.f32.mrb[0].mxu0
    %v1046 = vadd.f32 %v814, %v1045
    %v1047 = vpop.f32.mrb[0].mxu0
    %1048 = vdwg.mxu0
    %1049 = vmatprep.subr.bf16.mxu0 0
    %1050 = vmatpush1.bf16.msra.mxu0 %v960
    %1051 = vmatprep.subr.bf16.mxu0 0
    %1052 = vmatpush1.bf16.msra.mxu0 %v961
    %1053 = vmatprep.subr.bf16.mxu0 0
    %1054 = vmatpush1.bf16.msra.mxu0 %v962
    %1055 = vmatprep.subr.bf16.mxu0 0
    %1056 = vmatpush1.bf16.msra.mxu0 %v963
    %1057 = vmatprep.subr.bf16.mxu0 0
    %1058 = vmatpush1.bf16.msra.mxu0 %v964
    %1059 = vmatprep.subr.bf16.mxu0 0
    %1060 = vmatpush1.bf16.msra.mxu0 %v965
    %1061 = vmatprep.subr.bf16.mxu0 0
    %1062 = vmatpush1.bf16.msra.mxu0 %v966
    %1063 = vmatprep.subr.bf16.mxu0 0
    %1064 = vmatpush1.bf16.msra.mxu0 %v967
    %1065 = vmatprep.subr.bf16.mxu0 0
    %1066 = vmatpush1.bf16.msra.mxu0 %v968
    %1067 = vmatprep.subr.bf16.mxu0 0
    %1068 = vmatpush1.bf16.msra.mxu0 %v969
    %1069 = vmatprep.subr.bf16.mxu0 0
    %1070 = vmatpush1.bf16.msra.mxu0 %v970
    %1071 = vmatprep.subr.bf16.mxu0 0
    %1072 = vmatpush1.bf16.msra.mxu0 %v971
    %1073 = vmatprep.subr.bf16.mxu0 0
    %1074 = vmatpush1.bf16.msra.mxu0 %v972
    %1075 = vmatprep.subr.bf16.mxu0 0
    %1076 = vmatpush1.bf16.msra.mxu0 %v973
    %1077 = vmatprep.subr.bf16.mxu0 0
    %1078 = vmatpush1.bf16.msra.mxu0 %v974
    %1079 = vmatprep.subr.bf16.mxu0 0
    %1080 = vmatpush1.bf16.msra.mxu0 %v975
    %1081 = vmatprep.mubr.bf16.mxu0 %v744
    %1082 = vmatmul.mubr.bf16.gmra.mrb[0].mxu0 %v743
    %v1083 = vpop.f32.mrb[0].mxu0
    %v1084 = vadd.f32 %v1043, %v1083
    %v1085 = vpop.f32.mrb[0].mxu0
    %v1086 = vpop.f32.mrb[0].mxu0
    %v1087 = vadd.f32 %v1046, %v1086
    %v1088 = vpop.f32.mrb[0].mxu0
    %1089 = vdwg.mxu0
    %1090 = vst [vmem:[#allocation8] sm:$0xff] %v1084
    %1091 = vst [vmem:[#allocation8 + $0x8] sm:$0xff] %v1087
    // Predicated region
    $region42: #{expert_forward.1} parent=1 // pred_check
      _
    $region43: #{expert_forward.1} parent=1 // pred_check_branch
      %1093 = sbr.rel (0) target = $region45
    $region44: #{expert_forward.1} parent=1 // pred_region
      %s1095 = ssub.s32 256, 256
      %1096 = vsyncadd [#allocation4], %s1095
      %s1097 = sshll.u32 [#allocation8], 4
      %s1098 = int_to_ptr.vmem [resolvable:$true] %s1097
      %1103 = dma.vmem_to_hbm [thread:$0]  %s1098, 256, %s7, [#allocation4], 128, 128, 8
    $region45: #{expert_forward.1} parent=1 // pred_fallthru
      _
    // Predicated region
    $region46: #{expert_forward.1} parent=1 // pred_check
      _
    $region47: #{expert_forward.1} parent=1 // pred_check_branch
      %1105 = sbr.rel (0) target = $region49
    $region48: #{expert_forward.1} parent=1 // pred_region
      %1106 = dma.done [#allocation4], 256
    $region49: #{expert_forward.1} parent=1 // pred_fallthru
      _
    %1107 = vsyncpa [#allocation3], 1
    %1108 = vsyncpa [#allocation6], 1
    %1109 = vsyncpa [#allocation4], 1

</llo_original>
